<compile_context>
chip_gen: v5e
topology: v5e:2x2
jax: 0.10.0
libtpu: 0.0.40
codegen_flags: <defaults>
</compile_context>

<pallas_src>
import functools

import jax
import jax.numpy as jnp
from jax import lax
from jax.experimental import pallas as pl
from jax.experimental.pallas import tpu as pltpu

LANES = 128
_MIB = 1024 * 1024


def _chip_generation() -> int:
    """Best-effort TPU generation (4/5/6/7); 0 if unknown."""
    try:
        kind = jax.devices()[0].device_kind.lower()
    except Exception:
        return 0
    for g in (7, 6, 5, 4):
        if f"v{g}" in kind:
            return g
    return 0


def _sublane_pack(dtype) -> int:
    """Minimum second-to-last tile multiple for a dtype (sublane packing)."""
    bits = jnp.dtype(dtype).itemsize * 8
    if bits >= 32:
        return 8
    if bits == 16:
        return 16
    return 32


def _rect_sigmoid_jnp(x, gamma, zeta):
    """Pure-jnp reference / tail path (f32 compute, cast back)."""
    xf = x.astype(jnp.float32)
    y = jnp.clip(jax.nn.sigmoid(xf) * (zeta - gamma) + gamma, 0.0, 1.0)
    return y.astype(x.dtype)


def _rect_sigmoid_kernel(params_ref, x_ref, o_ref, *, compute_dtype):
    # params_ref: (2,) f32 in SMEM -> (gamma, zeta). Scalar reads are ~free.
    gamma = params_ref[0].astype(compute_dtype)
    zeta = params_ref[1].astype(compute_dtype)
    x = x_ref[...].astype(compute_dtype)
    # sigmoid hits the EUP; affine + clamp stay on the VPU. HBM-bound anyway.
    y = jax.nn.sigmoid(x) * (zeta - gamma) + gamma
    o_ref[...] = jnp.clip(y, 0.0, 1.0).astype(o_ref.dtype)


def _run_kernel_2d(x2d, params, *, donate):
    rows, lane_width = x2d.shape
    dtype = x2d.dtype
    itemsize = jnp.dtype(dtype).itemsize
    pack = _sublane_pack(dtype)
    gen = _chip_generation()

    # Per-generation block sizing: bigger blocks amortize the ~0.35us/step grid
    # overhead; v7x's ~3.2 TB/s HBM needs ~8 MiB blocks, v6e ~4 MiB, v5e 2 MiB.
    if gen >= 7:
        block_bytes = 8 * _MIB
    elif gen == 6:
        block_bytes = 4 * _MIB
    else:
        block_bytes = 2 * _MIB

    block_rows = max(pack, block_bytes // (lane_width * itemsize))
    block_rows -= block_rows % pack
    if block_rows >= rows:
        # Keep >= 2 grid steps when each block stays >= ~1 MiB so the
        # "parallel" axis can shard across v7x's 2 TensorCores (harmless on
        # single-TC chips: one extra ~0.35us grid step).
        half = ((pl.cdiv(rows, 2) + pack - 1) // pack) * pack
        if half < rows and half * lane_width * itemsize >= _MIB:
            block_rows = half
        else:
            block_rows = rows  # full-extent block is always legal
    grid = (pl.cdiv(rows, block_rows),)

    # bf16-native compute on v6e/v7x (bf16 VPU/EUP); f32 elsewhere (incl. v5e).
    if dtype == jnp.bfloat16 and gen >= 6:
        compute_dtype = jnp.bfloat16
    else:
        compute_dtype = jnp.float32

    # in + out double-buffered = 4 live block buffers, plus generous headroom.
    # Explicit so we never trip the per-chip scoped-VMEM default (16/32/32 MiB).
    vmem_limit = int(min(4 * block_rows * lane_width * itemsize + 16 * _MIB,
                         48 * _MIB))

    kernel = functools.partial(_rect_sigmoid_kernel, compute_dtype=compute_dtype)

    return pl.pallas_call(
        kernel,
        out_shape=jax.ShapeDtypeStruct((rows, lane_width), dtype),
        grid_spec=pltpu.PrefetchScalarGridSpec(
            num_scalar_prefetch=0,
            grid=grid,
            in_specs=[
                pl.BlockSpec(memory_space=pltpu.MemorySpace.SMEM),  # (gamma, zeta)
                pl.BlockSpec((block_rows, lane_width), lambda i: (i, 0)),
            ],
            out_specs=pl.BlockSpec((block_rows, lane_width), lambda i: (i, 0)),
        ),
        compiler_params=pltpu.CompilerParams(
            dimension_semantics=("parallel",),
            vmem_limit_bytes=vmem_limit,
        ),
        # Aliasing is opt-in: only saves HBM footprint (never bandwidth) and a
        # non-donated input would force a defensive full-tensor copy.
        input_output_aliases=({1: 0} if donate else {}),
    )(params, x2d)


def rectified_sigmoid(x, gamma, zeta, *, donate=False):
    """Elementwise rectified sigmoid: clamp(sigmoid(x)*(zeta-gamma)+gamma, 0, 1).

    Set donate=True only when the caller no longer needs `x` (lets XLA reuse
    its HBM buffer for the output).
    """
    orig_shape = x.shape
    n = x.size
    params = jnp.asarray([gamma, zeta], dtype=jnp.float32)

    body = (n // LANES) * LANES
    if body == 0:
        # Tiny tensor (< 128 elements): a single fused XLA elementwise pass is
        # already optimal; no Pallas grid needed.
        return _rect_sigmoid_jnp(x, gamma, zeta)

    # Lane-dense last dim (unmasked vector stores); prefer wide when possible.
    lane_width = LANES
    for c in (1024, 512, 256):
        if body % c == 0:
            lane_width = c
            break
    rows = body // lane_width

    if body == n:
        # Fast path (numel % 128 == 0, typical activations): no pad, no slice,
        # just a reshape to a 2-D slab.
        out2d = _run_kernel_2d(x.reshape(rows, lane_width), params, donate=donate)
        return out2d.reshape(orig_shape)

    # Odd-sized path: kernel over the 128-aligned body only; the <128-element
    # tail is plain jnp. No whole-tensor pad and no whole-tensor slice.
    flat = x.reshape(-1)
    body2d = lax.slice(flat, (0,), (body,)).reshape(rows, lane_width)
    out_body = _run_kernel_2d(body2d, params, donate=False)
    tail_out = _rect_sigmoid_jnp(lax.slice(flat, (body,), (n,)), gamma, zeta)
    return jnp.concatenate([out_body.reshape(-1), tail_out]).reshape(orig_shape)


if __name__ == "__main__":
    # Standard hard-concrete stretch parameters.
    gamma, zeta = -0.1, 1.1
    key = jax.random.PRNGKey(0)

    # 1) Typical NCHW activation, f32, numel % 128 == 0 (fast path).
    x = jax.random.normal(key, (2, 4, 16, 16), dtype=jnp.float32)
    out = jax.block_until_ready(rectified_sigmoid(x, gamma, zeta))
    ref = _rect_sigmoid_jnp(x, gamma, zeta)
    assert out.shape == x.shape and out.dtype == x.dtype
    assert jnp.allclose(out, ref, atol=1e-6, rtol=1e-6)

    # 2) Non-128-multiple numel with a >=128 body (kernel body + jnp tail).
    x_odd = jax.random.normal(jax.random.PRNGKey(1), (3, 5, 11), dtype=jnp.float32)
    out_odd = jax.block_until_ready(rectified_sigmoid(x_odd, gamma, zeta))
    assert out_odd.shape == x_odd.shape
    assert jnp.allclose(out_odd, _rect_sigmoid_jnp(x_odd, gamma, zeta),
                        atol=1e-6, rtol=1e-6)

    # 3) Tiny (<128 element) tensor -> pure-jnp fallback path.
    x_tiny = jax.random.normal(jax.random.PRNGKey(2), (3, 5, 7), dtype=jnp.float32)
    out_tiny = jax.block_until_ready(rectified_sigmoid(x_tiny, gamma, zeta))
    assert jnp.allclose(out_tiny, _rect_sigmoid_jnp(x_tiny, gamma, zeta),
                        atol=1e-6, rtol=1e-6)

    # 4) bf16 input (bf16-native compute on v6e/v7x, f32 compute elsewhere).
    x_bf16 = x.astype(jnp.bfloat16)
    out_bf16 = jax.block_until_ready(rectified_sigmoid(x_bf16, gamma, zeta))
    ref_bf16 = _rect_sigmoid_jnp(x_bf16, gamma, zeta)
    assert out_bf16.dtype == jnp.bfloat16
    assert jnp.allclose(out_bf16.astype(jnp.float32),
                        ref_bf16.astype(jnp.float32), atol=1e-2, rtol=1e-2)

    # TODO(synk): RectifiedSigmoid.inverse() is not part of forward() and is not
    # implemented here (it would be another trivial elementwise kernel).

    print("KERNEL_OK")
</pallas_src>

<mosaic_0001>
module attributes {stable_mosaic.version = 11 : i64} {
  func.func @_rect_sigmoid_kernel(%arg0: i32, %arg1: memref<2xf32, #tpu.memory_space<smem>>, %arg2: memref<2x1024xf32, #tpu.memory_space<vmem>>, %arg3: memref<2x1024xf32, #tpu.memory_space<vmem>>) attributes {dimension_semantics = [#tpu.dimension_semantics<parallel>], iteration_bounds = array<i64: 1>, scalar_prefetch = 0 : i64, scratch_operands = 0 : i64, tpu.core_type = #tpu.core_type<tc>, window_params = [{transform_indices = @transform_0, window_bounds = array<i64: 2>}, {transform_indices = @transform_1, window_bounds = array<i64: 2, 1024>}, {transform_indices = @transform_2, window_bounds = array<i64: 2, 1024>}]} {
    %c0 = arith.constant 0 : index
    %0 = memref.load %arg1[%c0] : memref<2xf32, #tpu.memory_space<smem>>
    %c1 = arith.constant 1 : index
    %1 = memref.load %arg1[%c1] : memref<2xf32, #tpu.memory_space<smem>>
    %c0_0 = arith.constant 0 : index
    %c0_1 = arith.constant 0 : index
    %2 = vector.load %arg2[%c0_0, %c0_1] : memref<2x1024xf32, #tpu.memory_space<vmem>>, vector<2x1024xf32>
    %3 = arith.negf %2 : vector<2x1024xf32>
    %4 = math.exp %3 : vector<2x1024xf32>
    %cst = arith.constant 1.000000e+00 : f32
    %5 = vector.broadcast %cst : f32 to vector<2x1024xf32>
    %6 = arith.addf %5, %4 : vector<2x1024xf32>
    %7 = arith.divf %5, %6 : vector<2x1024xf32>
    %8 = arith.subf %1, %0 : f32
    %9 = vector.broadcast %8 : f32 to vector<2x1024xf32>
    %10 = arith.mulf %7, %9 : vector<2x1024xf32>
    %11 = vector.broadcast %0 : f32 to vector<2x1024xf32>
    %12 = arith.addf %10, %11 : vector<2x1024xf32>
    %cst_2 = arith.constant 0.000000e+00 : f32
    %cst_3 = arith.constant 1.000000e+00 : f32
    %13 = vector.broadcast %cst_2 : f32 to vector<2x1024xf32>
    %14 = arith.maximumf %13, %12 : vector<2x1024xf32>
    %15 = vector.broadcast %cst_3 : f32 to vector<2x1024xf32>
    %16 = arith.minimumf %15, %14 : vector<2x1024xf32>
    %c0_4 = arith.constant 0 : index
    %c0_5 = arith.constant 0 : index
    %17 = vector.load %arg3[%c0_4, %c0_5] : memref<2x1024xf32, #tpu.memory_space<vmem>>, vector<2x1024xf32>
    tpu.vector_store %arg3[%c0_4, %c0_5], %16 {strides = array<i32>} : memref<2x1024xf32, #tpu.memory_space<vmem>>, vector<2x1024xf32>,
    return
  }
  func.func @transform_0(%arg0: i32) -> i32 {
    %c0_i32 = arith.constant 0 : i32
    %c0_i32_0 = arith.constant 0 : i32
    return %c0_i32 : i32
  }
  func.func @transform_1(%arg0: i32) -> (i32, i32) {
    %c0_i32 = arith.constant 0 : i32
    %c0_i32_0 = arith.constant 0 : i32
    return %arg0, %c0_i32 : i32, i32
  }
  func.func @transform_2(%arg0: i32) -> (i32, i32) {
    %c0_i32 = arith.constant 0 : i32
    %c0_i32_0 = arith.constant 0 : i32
    return %arg0, %c0_i32 : i32, i32
  }
}

</mosaic_0001>

<llo_original>
// kernel: tpu_custom_call.1
$region0: #{tpu_custom_call.1}
  #allocation0 [shape = 'u32[]', space=smem, size = 0x4, offset = 0x4, fixed_abs, tag = 'smem constant byte address 0x4 - core index']
  #allocation1 [shape = 'u32[72,128]{1,0:T(1,128)}', space=vmem, size = 0x9000, scoped, tag = 'internal scratch']
  %s0 = inlined_call_operand.hbm [shape: f32[2], index: 0, kind: input, shape index: {}]
  %s1 = inlined_call_operand.hbm [shape: f32[2,1024], index: 1, kind: input, shape index: {}]
  %s2 = inlined_call_operand.hbm [shape: f32[2,1024], index: 2, kind: output, shape index: {}]
  %s3 = sld [smem:[#allocation0]]
  $region26: #{tpu_custom_call.1} parent=0
    _
  %s5 = ssub.s32 1, %s3
  %s6 = scalar_select 0, %s5, %s3
  $region1: #{tpu_custom_call.1} parent=0
    #allocation2 [shape = 'u8[512]{0}', space=smem, size = 0x200, scoped, tag = 'input window, operand 0, single buffered']
    #allocation3 [shape = 's32[1]{0}', space=sflag, size = 0x4, scoped, tag = 'scoped memory for tpu_custom_call.1']
    #allocation4 [shape = 's32[1]{0}', space=sflag, size = 0x4, scoped, tag = 'scoped memory for tpu_custom_call.1']
    #allocation5 [shape = 's32[1]{0}', space=sflag, size = 0x4, scoped, tag = 'scoped memory for tpu_custom_call.1']
    #allocation6 [shape = 'u8[8192]{0}', space=vmem, size = 0x2000, scoped, tag = 'input window, operand 1, single buffered']
    #allocation7 [shape = 'u8[8192]{0}', space=vmem, size = 0x2000, scoped, tag = 'output window, operand 0, single buffered']
    %7 = vsyncpa [#allocation5], 0
    %8 = vsyncpa [#allocation3], 0
    %9 = vsyncpa [#allocation4], 0
    // Predicated region
    $region2: #{tpu_custom_call.1} parent=1 // pred_check
      _
    $region3: #{tpu_custom_call.1} parent=1 // pred_check_branch
      %11 = sbr.rel (0) target = $region5
    $region4: #{tpu_custom_call.1} parent=1 // pred_region
      %13 = vsyncadd [#allocation5], 0
      %s15 = sshll.u32 %s0, 4
      %s16 = int_to_ptr.hbm [resolvable:$true] %s15
      %18 = dma.hbm_to_smem %s16, 16, [#allocation2], [#allocation5]
    $region5: #{tpu_custom_call.1} parent=1 // pred_fallthru
      _
    // Predicated region
    $region6: #{tpu_custom_call.1} parent=1 // pred_check
      _
    $region7: #{tpu_custom_call.1} parent=1 // pred_check_branch
      %20 = sbr.rel (0) target = $region9
    $region8: #{tpu_custom_call.1} parent=1 // pred_region
      %22 = vsyncadd [#allocation3], 0
      %s24 = sshll.u32 %s1, 4
      %s25 = int_to_ptr.hbm [resolvable:$true] %s24
      %s26 = sshll.u32 [#allocation6], 4
      %s27 = int_to_ptr.vmem [resolvable:$true] %s26
      %29 = dma.hbm_to_vmem [thread:$0]  %s25, 256, %s27, [#allocation3]
    $region9: #{tpu_custom_call.1} parent=1 // pred_fallthru
      _
    // Predicated region
    $region10: #{tpu_custom_call.1} parent=1 // pred_check
      _
    $region11: #{tpu_custom_call.1} parent=1 // pred_check_branch
      %31 = sbr.rel (0) target = $region13
    $region12: #{tpu_custom_call.1} parent=1 // pred_region
      %33 = dma.done [#allocation5], 16
    $region13: #{tpu_custom_call.1} parent=1 // pred_fallthru
      _
    // Predicated region
    $region14: #{tpu_custom_call.1} parent=1 // pred_check
      _
    $region15: #{tpu_custom_call.1} parent=1 // pred_check_branch
      %35 = sbr.rel (0) target = $region17
    $region16: #{tpu_custom_call.1} parent=1 // pred_region
      %37 = dma.done [#allocation3], 256
    $region17: #{tpu_custom_call.1} parent=1 // pred_fallthru
      _
    %38 = sfence
    %s39 = sld [smem:[#allocation2]]
    %s40 = sld [smem:[#allocation2 + $0x1]]
    %v41 = vld [vmem:[#allocation6] sm:$0xff]
    %v42 = vld [vmem:[#allocation6 + $0x8] sm:$0xff]
    %v43 = vxor.u32 %v41, 2147483648
    %v44 = vxor.u32 %v42, 2147483648
    %v45 = vmul.f32 %v43, 1.442695
    %v46 = vpow.pop %v45
    %v47 = vmul.f32 %v44, 1.442695
    %v48 = vpow.pop %v47
    %v49 = vadd.f32 %v46, 1.0
    %v50 = vadd.f32 %v48, 1.0
    %v51 = vrcp.pop %v49
    %v52 = vmul.f32 %v49, %v51
    %v53 = vsub.f32 1.0, %v52
    %v54 = vmul.f32 %v51, %v53
    %v55 = vadd.f32 %v51, %v54
    %vm56 = vweird.f32 %v49
    %vm57 = vweird.f32 %v51
    %vm58 = vmor %vm56, %vm57
    %v59 = vsel %vm58, %v51, %v55
    %v60 = vand.u32 2147483647, %v49
    %vm61 = vcmp.eq.f32.partialorder %v60, 8.507059e+37
    %v62 = vand.u32 %v49, 2147483648
    %v63 = vor.u32 1.1754944e-38, %v62
    %v64 = vsel %vm61, %v63, %v59
    %v65 = vmul.f32 1.0, %v64
    %v66 = vrcp.pop %v50
    %v67 = vmul.f32 %v50, %v66
    %v68 = vsub.f32 1.0, %v67
    %v69 = vmul.f32 %v66, %v68
    %v70 = vadd.f32 %v66, %v69
    %vm71 = vweird.f32 %v50
    %vm72 = vweird.f32 %v66
    %vm73 = vmor %vm71, %vm72
    %v74 = vsel %vm73, %v66, %v70
    %v75 = vand.u32 2147483647, %v50
    %vm76 = vcmp.eq.f32.partialorder %v75, 8.507059e+37
    %v77 = vand.u32 %v50, 2147483648
    %v78 = vor.u32 1.1754944e-38, %v77
    %v79 = vsel %vm76, %v78, %v74
    %v80 = vmul.f32 1.0, %v79
    %s81 = ssub.f32 %s40, %s39
    %v82 = vstv %s81
    %v83 = vmul.f32 %v65, %v82
    %v84 = vmul.f32 %v80, %v82
    %v85 = vstv %s39
    %v86 = vadd.f32 %v83, %v85
    %v87 = vadd.f32 %v84, %v85
    %v88 = vmax.f32 %v86, 0.0
    %v89 = vmax.f32 %v87, 0.0
    %v90 = vmin.f32 %v88, 1.0
    %v91 = vmin.f32 %v89, 1.0
    %92 = vst [vmem:[#allocation7] sm:$0xff] %v90
    %93 = vst [vmem:[#allocation7 + $0x8] sm:$0xff] %v91
    // Predicated region
    $region18: #{tpu_custom_call.1} parent=1 // pred_check
      _
    $region19: #{tpu_custom_call.1} parent=1 // pred_check_branch
      %95 = sbr.rel (0) target = $region21
    $region20: #{tpu_custom_call.1} parent=1 // pred_region
      %97 = vsyncadd [#allocation4], 0
      %s99 = sshll.u32 [#allocation7], 4
      %s100 = int_to_ptr.vmem [resolvable:$true] %s99
      %s101 = sshll.u32 %s2, 4
      %s102 = int_to_ptr.hbm [resolvable:$true] %s101
      %104 = dma.vmem_to_hbm [thread:$0]  %s100, 256, %s102, [#allocation4]
    $region21: #{tpu_custom_call.1} parent=1 // pred_fallthru
      _
    // Predicated region
    $region22: #{tpu_custom_call.1} parent=1 // pred_check
      _
    $region23: #{tpu_custom_call.1} parent=1 // pred_check_branch
      %106 = sbr.rel (0) target = $region25
    $region24: #{tpu_custom_call.1} parent=1 // pred_region
      %108 = dma.done [#allocation4], 256
    $region25: #{tpu_custom_call.1} parent=1 // pred_fallthru
      _
    %109 = vsyncpa [#allocation3], 1
    %110 = vsyncpa [#allocation4], 1
    %111 = vsyncpa [#allocation5], 1

</llo_original>
